<compile_context>
chip_gen: v6e
topology: v6e:2x2x1
jax: 0.10.0
libtpu: 0.0.40
codegen_flags: <defaults>
</compile_context>

<pallas_src>
import functools

import jax
import jax.numpy as jnp
from jax import lax
from jax.experimental import pallas as pl
from jax.experimental.pallas import tpu as pltpu


def _round_up(a, m):
    return ((a + m - 1) // m) * m


def _head_transform_kernel(x_ref, w_ref, p_ref, o_ref, *, eps, hidden):
    # x_ref: (TR, Hp)  input-row tile (Hp = hidden padded to multiple of 128)
    # w_ref: (Hp, Hp)  dense weight, pre-transposed so y = x @ w (zero padded)
    # p_ref: (3,  Hp)  stacked [dense.bias; ln.weight; ln.bias] (zero padded)
    hp = x_ref.shape[-1]

    # MXU matmul in the operands' native dtype, f32 accumulation.
    h = jnp.dot(x_ref[...], w_ref[...], preferred_element_type=jnp.float32)

    params = p_ref[...].astype(jnp.float32)
    bias, gamma, beta = params[0:1, :], params[1:2, :], params[2:3, :]
    h = h + bias

    if hidden != hp:
        lane = lax.broadcasted_iota(jnp.int32, h.shape, dimension=1)
        valid = lane < hidden
        h = jnp.where(valid, h, 0.0)  # zero the padded lanes

    # mish(x) = x * tanh(softplus(x)) = x * (1 - 2 / ((1 + e^x)^2 + 1))
    # -> one exp + one reciprocal instead of exp + log1p + tanh.
    e = jnp.exp(jnp.minimum(h, 20.0))
    s = 1.0 + e
    t = 1.0 - 2.0 * pl.reciprocal(s * s + 1.0)        # exact reciprocal (accuracy)
    h = jnp.where(h > 20.0, h, h * t)                 # mish(x) -> x for large x
    # (padded lanes: h == 0 -> mish(0) == 0, so they stay zero)

    # LayerNorm over the real hidden lanes (biased variance, matches torch).
    inv_h = 1.0 / hidden
    mean = jnp.sum(h, axis=-1, keepdims=True) * inv_h
    centered = h - mean
    if hidden != hp:
        centered = jnp.where(valid, centered, 0.0)
    var = jnp.sum(centered * centered, axis=-1, keepdims=True) * inv_h
    y = centered * lax.rsqrt(var + eps) * gamma + beta

    o_ref[...] = y.astype(o_ref.dtype)


def prepare_head_transform_params(w, b, gamma, beta, hidden_pad=None):
    """One-time parameter prep (do NOT run per forward call):
    transpose the torch Linear weight ([out,in] -> [in,out]), pad the hidden dim
    to a lane-aligned multiple of 128, and stack (bias, ln_gamma, ln_beta) into
    a single (3, Hp) constant array."""
    w = jnp.asarray(w)
    H = w.shape[0]
    hp = hidden_pad or _round_up(H, 128)
    w_t = jnp.pad(w.T, ((0, hp - H), (0, hp - H)))
    params = jnp.stack(
        [jnp.asarray(b), jnp.asarray(gamma), jnp.asarray(beta)]
    ).astype(jnp.float32)
    params = jnp.pad(params, ((0, 0), (0, hp - H)))
    return w_t, params


def bert_prediction_head_transform(x, w_t, params, *, hidden, eps=1e-12,
                                   tile_rows=512):
    """x: [B, S, H]; w_t: [Hp, Hp] pre-transposed/padded weight; params: [3, Hp]."""
    B, S, H = x.shape
    assert H == hidden
    R = B * S
    hp = w_t.shape[0]

    x2 = x.reshape(R, H)
    if hp != H:
        x2 = jnp.pad(x2, ((0, 0), (0, hp - H)))

    # Pick the biggest row tile that fits a conservative VMEM working budget
    # (fits v7x's 64 MiB per-TC VMEM as well as v5e/v6e's 128 MiB).
    tr = min(tile_rows, _round_up(R, 8))
    tr = max(8, (tr // 8) * 8)
    dtype_bytes = jnp.dtype(x.dtype).itemsize
    w_vmem = 2 * w_t.size * jnp.dtype(w_t.dtype).itemsize   # double-buffered weight
    budget = 40 * 1024 * 1024
    while tr > 8 and w_vmem + 4 * tr * hp * dtype_bytes > budget:
        tr = max(8, (tr // 2 // 8) * 8)

    rp = _round_up(R, tr)
    if rp != R:
        x2 = jnp.pad(x2, ((0, rp - R), (0, 0)))   # masked tail via row padding

    vmem_limit = min(
        max(int(1.5 * (w_vmem + 4 * tr * hp * dtype_bytes)) + (2 << 20), 32 << 20),
        48 << 20,
    )

    kernel = functools.partial(_head_transform_kernel, eps=eps, hidden=hidden)

    out2 = pl.pallas_call(
        kernel,
        out_shape=jax.ShapeDtypeStruct((rp, hp), x.dtype),
        grid_spec=pltpu.PrefetchScalarGridSpec(
            num_scalar_prefetch=0,
            grid=(rp // tr,),
            in_specs=[
                pl.BlockSpec((tr, hp), lambda i: (i, 0)),   # input row tile
                pl.BlockSpec((hp, hp), lambda i: (0, 0)),   # resident weight
                pl.BlockSpec((3, hp), lambda i: (0, 0)),    # bias/gamma/beta
            ],
            out_specs=pl.BlockSpec((tr, hp), lambda i: (i, 0)),
        ),
        compiler_params=pltpu.CompilerParams(
            dimension_semantics=("parallel",),   # row tiles shard across TCs on v7x
            vmem_limit_bytes=vmem_limit,
        ),
    )(x2, w_t, params)

    return out2[:R, :H].reshape(B, S, H)


if __name__ == "__main__":
    # Small config consistent with the module: hidden_size=32, layer_norm_eps=1e-12
    B, S, H = 2, 8, 32
    key = jax.random.PRNGKey(0)
    kx, kw, kb, kg, kbeta = jax.random.split(key, 5)

    x = jax.random.normal(kx, (B, S, H), dtype=jnp.float32)
    w = jax.random.normal(kw, (H, H), dtype=jnp.float32) * 0.02   # dense.weight [out, in]
    b = jax.random.normal(kb, (H,), dtype=jnp.float32) * 0.02     # dense.bias
    gamma = jnp.ones((H,), dtype=jnp.float32) + 0.01 * jax.random.normal(kg, (H,), dtype=jnp.float32)
    beta = 0.01 * jax.random.normal(kbeta, (H,), dtype=jnp.float32)

    # One-time weight prep (transpose + lane padding + constant folding).
    w_t, params = prepare_head_transform_params(w, b, gamma, beta)

    fwd = jax.jit(functools.partial(bert_prediction_head_transform,
                                    hidden=H, eps=1e-12))
    out = fwd(x, w_t, params)
    jax.block_until_ready(out)

    # Pure-JAX reference matching the PyTorch module (softplus+tanh mish, LayerNorm).
    h_ref = x.reshape(-1, H) @ w.T + b
    sp = jnp.maximum(h_ref, 0.0) + jnp.log1p(jnp.exp(-jnp.abs(h_ref)))
    h_ref = h_ref * jnp.tanh(sp)
    mu = h_ref.mean(-1, keepdims=True)
    var = ((h_ref - mu) ** 2).mean(-1, keepdims=True)
    ref = ((h_ref - mu) / jnp.sqrt(var + 1e-12)) * gamma + beta
    ref = ref.reshape(B, S, H)
    assert jnp.allclose(out, ref, atol=2e-5, rtol=2e-5), "mismatch vs reference"

    print("KERNEL_OK")
</pallas_src>

<mosaic_0001>
module attributes {stable_mosaic.version = 11 : i64} {
  func.func @_head_transform_kernel(%arg0: i32, %arg1: memref<16x128xf32, #tpu.memory_space<vmem>>, %arg2: memref<128x128xf32, #tpu.memory_space<vmem>>, %arg3: memref<3x128xf32, #tpu.memory_space<vmem>>, %arg4: memref<16x128xf32, #tpu.memory_space<vmem>>) attributes {dimension_semantics = [#tpu.dimension_semantics<parallel>], iteration_bounds = array<i64: 1>, scalar_prefetch = 0 : i64, scratch_operands = 0 : i64, tpu.core_type = #tpu.core_type<tc>, window_params = [{transform_indices = @transform_0, window_bounds = array<i64: 16, 128>}, {pipeline_mode = #tpu.pipeline_mode<synchronous>, transform_indices = @transform_1, window_bounds = array<i64: 128, 128>}, {pipeline_mode = #tpu.pipeline_mode<synchronous>, transform_indices = @transform_2, window_bounds = array<i64: 3, 128>}, {transform_indices = @transform_3, window_bounds = array<i64: 16, 128>}]} {
    %c0 = arith.constant 0 : index
    %c0_0 = arith.constant 0 : index
    %0 = vector.load %arg1[%c0, %c0_0] : memref<16x128xf32, #tpu.memory_space<vmem>>, vector<16x128xf32>
    %c0_1 = arith.constant 0 : index
    %c0_2 = arith.constant 0 : index
    %1 = vector.load %arg2[%c0_1, %c0_2] : memref<128x128xf32, #tpu.memory_space<vmem>>, vector<128x128xf32>
    %cst = arith.constant dense<0.000000e+00> : vector<16x128xf32>
    %2 = tpu.matmul %0, %1, %cst {dimension_numbers = #tpu.dot_dimension_numbers<[1], [0], [0], [1], [0, 0, 1, 1], [], []>} : vector<16x128xf32>, vector<128x128xf32>, vector<16x128xf32> -> vector<16x128xf32>
    %c0_3 = arith.constant 0 : index
    %c0_4 = arith.constant 0 : index
    %3 = vector.load %arg3[%c0_3, %c0_4] : memref<3x128xf32, #tpu.memory_space<vmem>>, vector<3x128xf32>
    %4 = vector.extract_strided_slice %3 {offsets = [0, 0], sizes = [1, 128], strides = [1, 1]} : vector<3x128xf32> to vector<1x128xf32>
    %5 = vector.extract_strided_slice %3 {offsets = [1, 0], sizes = [1, 128], strides = [1, 1]} : vector<3x128xf32> to vector<1x128xf32>
    %6 = vector.extract_strided_slice %3 {offsets = [2, 0], sizes = [1, 128], strides = [1, 1]} : vector<3x128xf32> to vector<1x128xf32>
    %7 = vector.broadcast %4 : vector<1x128xf32> to vector<16x128xf32>
    %8 = arith.addf %2, %7 : vector<16x128xf32>
    %9 = tpu.iota {dimensions = array<i32: 1>} : vector<16x128xi32>
    %c32_i32 = arith.constant 32 : i32
    %10 = vector.broadcast %c32_i32 : i32 to vector<16x128xi32>
    %11 = arith.cmpi slt, %9, %10 : vector<16x128xi32>
    %cst_5 = arith.constant 0.000000e+00 : f32
    %12 = vector.broadcast %cst_5 : f32 to vector<16x128xf32>
    %13 = arith.select %11, %8, %12 : vector<16x128xi1>, vector<16x128xf32>
    %cst_6 = arith.constant 2.000000e+01 : f32
    %14 = vector.broadcast %cst_6 : f32 to vector<16x128xf32>
    %15 = arith.minimumf %13, %14 : vector<16x128xf32>
    %16 = math.exp %15 : vector<16x128xf32>
    %cst_7 = arith.constant 1.000000e+00 : f32
    %17 = vector.broadcast %cst_7 : f32 to vector<16x128xf32>
    %18 = arith.addf %17, %16 : vector<16x128xf32>
    %19 = arith.mulf %18, %18 : vector<16x128xf32>
    %cst_8 = arith.constant 1.000000e+00 : f32
    %20 = vector.broadcast %cst_8 : f32 to vector<16x128xf32>
    %21 = arith.addf %19, %20 : vector<16x128xf32>
    %22 = tpu.reciprocal %21 : vector<16x128xf32> -> vector<16x128xf32>
    %cst_9 = arith.constant 2.000000e+00 : f32
    %23 = vector.broadcast %cst_9 : f32 to vector<16x128xf32>
    %24 = arith.mulf %23, %22 : vector<16x128xf32>
    %cst_10 = arith.constant 1.000000e+00 : f32
    %25 = vector.broadcast %cst_10 : f32 to vector<16x128xf32>
    %26 = arith.subf %25, %24 : vector<16x128xf32>
    %cst_11 = arith.constant 2.000000e+01 : f32
    %27 = vector.broadcast %cst_11 : f32 to vector<16x128xf32>
    %28 = arith.cmpf ogt, %13, %27 : vector<16x128xf32>
    %29 = arith.mulf %13, %26 : vector<16x128xf32>
    %30 = arith.select %28, %13, %29 : vector<16x128xi1>, vector<16x128xf32>
    %cst_12 = arith.constant dense<0.000000e+00> : vector<16xf32>
    %31 = vector.multi_reduction <add>, %30, %cst_12 [1] : vector<16x128xf32> to vector<16xf32>
    %32 = vector.shape_cast %31 : vector<16xf32> to vector<16x1xf32>
    %cst_13 = arith.constant 3.125000e-02 : f32
    %33 = vector.broadcast %cst_13 : f32 to vector<16x1xf32>
    %34 = arith.mulf %32, %33 : vector<16x1xf32>
    %35 = vector.broadcast %34 : vector<16x1xf32> to vector<16x128xf32>
    %36 = arith.subf %30, %35 : vector<16x128xf32>
    %cst_14 = arith.constant 0.000000e+00 : f32
    %37 = vector.broadcast %cst_14 : f32 to vector<16x128xf32>
    %38 = arith.select %11, %36, %37 : vector<16x128xi1>, vector<16x128xf32>
    %39 = arith.mulf %38, %38 : vector<16x128xf32>
    %cst_15 = arith.constant dense<0.000000e+00> : vector<16xf32>
    %40 = vector.multi_reduction <add>, %39, %cst_15 [1] : vector<16x128xf32> to vector<16xf32>
    %41 = vector.shape_cast %40 : vector<16xf32> to vector<16x1xf32>
    %cst_16 = arith.constant 3.125000e-02 : f32
    %42 = vector.broadcast %cst_16 : f32 to vector<16x1xf32>
    %43 = arith.mulf %41, %42 : vector<16x1xf32>
    %cst_17 = arith.constant 9.99999996E-13 : f32
    %44 = vector.broadcast %cst_17 : f32 to vector<16x1xf32>
    %45 = arith.addf %43, %44 : vector<16x1xf32>
    %46 = math.rsqrt %45 : vector<16x1xf32>
    %47 = vector.broadcast %46 : vector<16x1xf32> to vector<16x128xf32>
    %48 = arith.mulf %38, %47 : vector<16x128xf32>
    %49 = vector.broadcast %5 : vector<1x128xf32> to vector<16x128xf32>
    %50 = arith.mulf %48, %49 : vector<16x128xf32>
    %51 = vector.broadcast %6 : vector<1x128xf32> to vector<16x128xf32>
    %52 = arith.addf %50, %51 : vector<16x128xf32>
    %c0_18 = arith.constant 0 : index
    %c0_19 = arith.constant 0 : index
    %53 = vector.load %arg4[%c0_18, %c0_19] : memref<16x128xf32, #tpu.memory_space<vmem>>, vector<16x128xf32>
    tpu.vector_store %arg4[%c0_18, %c0_19], %52 {strides = array<i32>} : memref<16x128xf32, #tpu.memory_space<vmem>>, vector<16x128xf32>,
    return
  }
  func.func @transform_0(%arg0: i32) -> (i32, i32) {
    %c0_i32 = arith.constant 0 : i32
    %c0_i32_0 = arith.constant 0 : i32
    return %arg0, %c0_i32 : i32, i32
  }
  func.func @transform_1(%arg0: i32) -> (i32, i32) {
    %c0_i32 = arith.constant 0 : i32
    %c0_i32_0 = arith.constant 0 : i32
    %c0_i32_1 = arith.constant 0 : i32
    return %c0_i32, %c0_i32_0 : i32, i32
  }
  func.func @transform_2(%arg0: i32) -> (i32, i32) {
    %c0_i32 = arith.constant 0 : i32
    %c0_i32_0 = arith.constant 0 : i32
    %c0_i32_1 = arith.constant 0 : i32
    return %c0_i32, %c0_i32_0 : i32, i32
  }
  func.func @transform_3(%arg0: i32) -> (i32, i32) {
    %c0_i32 = arith.constant 0 : i32
    %c0_i32_0 = arith.constant 0 : i32
    return %arg0, %c0_i32 : i32, i32
  }
}

</mosaic_0001>

<llo_original>
// kernel: bert_prediction_head_transform.1
$region0: #{bert_prediction_head_transform.1}
  #allocation0 [shape = 'u32[]', space=smem, size = 0x4, offset = 0x4, fixed_abs, tag = 'smem constant byte address 0x4 - core index']
  #allocation1 [shape = 'u32[144,128]{1,0:T(1,128)}', space=vmem, size = 0x12000, scoped, tag = 'internal scratch']
  %s0 = inlined_call_operand.vmem [shape: f32[16,128], index: 0, kind: input, shape index: {}]
  %s1 = inlined_call_operand.hbm [shape: f32[128,128], index: 1, kind: input, shape index: {}]
  %s2 = inlined_call_operand.vmem [shape: f32[3,128], index: 2, kind: input, shape index: {}]
  %s3 = inlined_call_operand.vmem [shape: f32[16,128], index: 3, kind: output, shape index: {}]
  %s4 = sld [smem:[#allocation0]]
  $region26: #{bert_prediction_head_transform.1} parent=0
    _
  %s6 = ssub.s32 1, %s4
  %s7 = scalar_select 0, %s6, %s4
  $region1: #{bert_prediction_head_transform.1} parent=0
    #allocation2 [shape = 'u8[65536]{0}', space=vmem, size = 0x10000, scoped, tag = 'input window, operand 1, single buffered']
    #allocation3 [shape = 's32[1]{0}', space=sflag, size = 0x4, scoped, tag = 'scoped memory for bert_prediction_head_transform.1']
    %8 = vsyncpa [#allocation3], 0
    // Predicated region
    $region2: #{bert_prediction_head_transform.1} parent=1 // pred_check
      _
    $region3: #{bert_prediction_head_transform.1} parent=1 // pred_check_branch
      %10 = sbr.rel (0) target = $region5
    $region4: #{bert_prediction_head_transform.1} parent=1 // pred_region
      _
    $region5: #{bert_prediction_head_transform.1} parent=1 // pred_fallthru
      _
    // Predicated region
    $region6: #{bert_prediction_head_transform.1} parent=1 // pred_check
      _
    $region7: #{bert_prediction_head_transform.1} parent=1 // pred_check_branch
      %12 = sbr.rel (0) target = $region9
    $region8: #{bert_prediction_head_transform.1} parent=1 // pred_region
      %s14 = ssub.s32 2048, 2048
      %15 = vsyncadd [#allocation3], %s14
      %s16 = sshll.u32 [#allocation2], 4
      %s17 = int_to_ptr.vmem [resolvable:$true] %s16
      %22 = dma.hbm_to_vmem [thread:$0]  %s1, 2048, %s17, [#allocation3], 128, 128, 8
    $region9: #{bert_prediction_head_transform.1} parent=1 // pred_fallthru
      _
    // Predicated region
    $region10: #{bert_prediction_head_transform.1} parent=1 // pred_check
      _
    $region11: #{bert_prediction_head_transform.1} parent=1 // pred_check_branch
      %24 = sbr.rel (0) target = $region13
    $region12: #{bert_prediction_head_transform.1} parent=1 // pred_region
      _
    $region13: #{bert_prediction_head_transform.1} parent=1 // pred_fallthru
      _
    // Predicated region
    $region14: #{bert_prediction_head_transform.1} parent=1 // pred_check
      _
    $region15: #{bert_prediction_head_transform.1} parent=1 // pred_check_branch
      %26 = sbr.rel (0) target = $region17
    $region16: #{bert_prediction_head_transform.1} parent=1 // pred_region
      %27 = dma.done [#allocation3], 2048
    $region17: #{bert_prediction_head_transform.1} parent=1 // pred_fallthru
      _
    %v28 = vld [vmem:[%s0] sm:$0xff]
    %v29 = vld [vmem:[%s0 + $0x8] sm:$0xff]
    %v30 = vld [vmem:[#allocation2] sm:$0xff]
    %v31 = vld [vmem:[#allocation2 + $0x8] sm:$0xff]
    %v32 = vld [vmem:[#allocation2 + $0x10] sm:$0xff]
    %v33 = vld [vmem:[#allocation2 + $0x18] sm:$0xff]
    %v34 = vld [vmem:[#allocation2 + $0x20] sm:$0xff]
    %v35 = vld [vmem:[#allocation2 + $0x28] sm:$0xff]
    %v36 = vld [vmem:[#allocation2 + $0x30] sm:$0xff]
    %v37 = vld [vmem:[#allocation2 + $0x38] sm:$0xff]
    %v38 = vld [vmem:[#allocation2 + $0x40] sm:$0xff]
    %v39 = vld [vmem:[#allocation2 + $0x48] sm:$0xff]
    %v40 = vld [vmem:[#allocation2 + $0x50] sm:$0xff]
    %v41 = vld [vmem:[#allocation2 + $0x58] sm:$0xff]
    %v42 = vld [vmem:[#allocation2 + $0x60] sm:$0xff]
    %v43 = vld [vmem:[#allocation2 + $0x68] sm:$0xff]
    %v44 = vld [vmem:[#allocation2 + $0x70] sm:$0xff]
    %v45 = vld [vmem:[#allocation2 + $0x78] sm:$0xff]
    %v46 = vld [vmem:[%s2] sm:$0x7]
    %v47 = vlaneseq
    %v48 = vshrl.u32 %v47, 7
    %v49 = vsub.s32 0, %v48
    %v50 = vrot.slane %v46, %v49
    %51 = vmatprep.subr.mxu0 0.0
    %52 = vmatpush1.msra.mxu0 %v45
    %53 = vmatprep.subr.mxu0 0.0
    %54 = vmatpush1.msra.mxu0 %v44
    %55 = vmatprep.subr.mxu0 0.0
    %56 = vmatpush1.msra.mxu0 %v43
    %57 = vmatprep.subr.mxu0 0.0
    %58 = vmatpush1.msra.mxu0 %v42
    %59 = vmatprep.subr.mxu0 0.0
    %60 = vmatpush1.msra.mxu0 %v41
    %61 = vmatprep.subr.mxu0 0.0
    %62 = vmatpush1.msra.mxu0 %v40
    %63 = vmatprep.subr.mxu0 0.0
    %64 = vmatpush1.msra.mxu0 %v39
    %65 = vmatprep.subr.mxu0 0.0
    %66 = vmatpush1.msra.mxu0 %v38
    %67 = vmatprep.subr.mxu0 0.0
    %68 = vmatpush1.msra.mxu0 %v37
    %69 = vmatprep.subr.mxu0 0.0
    %70 = vmatpush1.msra.mxu0 %v36
    %71 = vmatprep.subr.mxu0 0.0
    %72 = vmatpush1.msra.mxu0 %v35
    %73 = vmatprep.subr.mxu0 0.0
    %74 = vmatpush1.msra.mxu0 %v34
    %75 = vmatprep.subr.mxu0 0.0
    %76 = vmatpush1.msra.mxu0 %v33
    %77 = vmatprep.subr.mxu0 0.0
    %78 = vmatpush1.msra.mxu0 %v32
    %79 = vmatprep.subr.mxu0 0.0
    %80 = vmatpush1.msra.mxu0 %v31
    %81 = vmatprep.subr.mxu0 0.0
    %82 = vmatpush1.msra.mxu0 %v30
    %83 = vmatprep.subr.mxu0 0.0
    %84 = vmatpush2.msra.mxu0 0.0
    %85 = vmatprep.subr.mxu0 0.0
    %86 = vmatpush2.msra.mxu0 0.0
    %87 = vmatprep.subr.mxu0 0.0
    %88 = vmatpush2.msra.mxu0 0.0
    %89 = vmatprep.subr.mxu0 0.0
    %90 = vmatpush2.msra.mxu0 0.0
    %91 = vmatprep.subr.mxu0 0.0
    %92 = vmatpush2.msra.mxu0 0.0
    %93 = vmatprep.subr.mxu0 0.0
    %94 = vmatpush2.msra.mxu0 0.0
    %95 = vmatprep.subr.mxu0 0.0
    %96 = vmatpush2.msra.mxu0 0.0
    %97 = vmatprep.subr.mxu0 0.0
    %98 = vmatpush2.msra.mxu0 0.0
    %99 = vmatprep.subr.mxu0 0.0
    %100 = vmatpush2.msra.mxu0 0.0
    %101 = vmatprep.subr.mxu0 0.0
    %102 = vmatpush2.msra.mxu0 0.0
    %103 = vmatprep.subr.mxu0 0.0
    %104 = vmatpush2.msra.mxu0 0.0
    %105 = vmatprep.subr.mxu0 0.0
    %106 = vmatpush2.msra.mxu0 0.0
    %107 = vmatprep.subr.mxu0 0.0
    %108 = vmatpush2.msra.mxu0 0.0
    %109 = vmatprep.subr.mxu0 0.0
    %110 = vmatpush2.msra.mxu0 0.0
    %111 = vmatprep.subr.mxu0 0.0
    %112 = vmatpush2.msra.mxu0 0.0
    %113 = vmatprep.subr.mxu0 0.0
    %114 = vmatpush2.msra.mxu0 0.0
    %115 = vmatprep.mubr.f32.mxu0 0.0
    %116 = vmatmul.mubr.f32.gmra.mxu0 %v28
    %v117 = vpop.f32.mrf.mxu0
    %v118 = vadd.f32 %v50, %v117
    %v119 = vpop.f32.mrf.mxu0
    %120 = vmatprep.mubr.f32.mxu0 0.0
    %121 = vmatmul.mubr.f32.gmra.mxu0 %v29
    %v122 = vpop.f32.mrf.mxu0
    %v123 = vadd.f32 %v50, %v122
    %v124 = vpop.f32.mrf.mxu0
    %125 = vdwg.mxu0
    %v126 = vlaneseq
    %v127 = vand.u32 %v126, 127
    %vm128 = vcmp.lt.s32.totalorder %v127, 32
    %v129 = vsel %vm128, %v118, 0.0
    %v130 = vsel %vm128, %v123, 0.0
    %v131 = vmin.f32 %v129, 20.0
    %v132 = vmin.f32 %v130, 20.0
    %v133 = vmul.f32 %v131, 1.442695
    %v134 = vpow.pop %v133
    %v135 = vmul.f32 %v132, 1.442695
    %v136 = vpow.pop %v135
    %v137 = vadd.f32 %v134, 1.0
    %v138 = vadd.f32 %v136, 1.0
    %v139 = vmul.f32 %v137, %v137
    %v140 = vmul.f32 %v138, %v138
    %v141 = vadd.f32 %v139, 1.0
    %v142 = vadd.f32 %v140, 1.0
    %v143 = vrcp.pop %v141
    %v144 = vrcp.pop %v142
    %v145 = vmul.f32 %v143, 2.0
    %v146 = vmul.f32 %v144, 2.0
    %v147 = vsub.f32 1.0, %v145
    %v148 = vsub.f32 1.0, %v146
    %vm149 = vcmp.gt.f32.partialorder %v129, 20.0
    %vm150 = vcmp.gt.f32.partialorder %v130, 20.0
    %v151 = vmul.f32 %v129, %v147
    %v152 = vmul.f32 %v130, %v148
    %v153 = vsel %vm149, %v129, %v151
    %v154 = vsel %vm150, %v130, %v152
    %155 = vadd.xlane.f32.xlu0 %v153
    %v156 = vpop.xlane.xlu0 %155
    %157 = vadd.xlane.f32.xlu0 %v154
    %v158 = vpop.xlane.xlu0 %157
    %v159 = vmul.f32 %v156, 0.03125
    %v160 = vmul.f32 %v158, 0.03125
    %v161 = vsub.f32 %v153, %v159
    %v162 = vsub.f32 %v154, %v160
    %v163 = vsel %vm128, %v161, 0.0
    %v164 = vsel %vm128, %v162, 0.0
    %v165 = vmul.f32 %v163, %v163
    %v166 = vmul.f32 %v164, %v164
    %167 = vadd.xlane.f32.xlu0 %v165
    %v168 = vpop.xlane.xlu0 %167
    %169 = vadd.xlane.f32.xlu0 %v166
    %v170 = vpop.xlane.xlu0 %169
    %v171 = vmul.f32 %v168, 0.03125
    %v172 = vmul.f32 %v170, 0.03125
    %v173 = vadd.f32 %v171, 1e-12
    %v174 = vadd.f32 %v172, 1e-12
    %v175 = vrsqrt.pop %v173
    %v176 = vrsqrt.pop %v174
    %v177 = vmul.f32 %v163, %v175
    %v178 = vmul.f32 %v164, %v176
    %v179 = vlaneseq
    %v180 = vshrl.u32 %v179, 7
    %v181 = vsub.s32 1, %v180
    %v182 = vrot.slane %v46, %v181
    %v183 = vmul.f32 %v177, %v182
    %v184 = vmul.f32 %v178, %v182
    %v185 = vlaneseq
    %v186 = vshrl.u32 %v185, 7
    %v187 = vsub.s32 2, %v186
    %v188 = vrot.slane %v46, %v187
    %v189 = vadd.f32 %v183, %v188
    %v190 = vadd.f32 %v184, %v188
    %191 = vst [vmem:[%s3] sm:$0xff] %v189
    %192 = vst [vmem:[%s3 + $0x8] sm:$0xff] %v190
    // Predicated region
    $region18: #{bert_prediction_head_transform.1} parent=1 // pred_check
      _
    $region19: #{bert_prediction_head_transform.1} parent=1 // pred_check_branch
      %194 = sbr.rel (0) target = $region21
    $region20: #{bert_prediction_head_transform.1} parent=1 // pred_region
      _
    $region21: #{bert_prediction_head_transform.1} parent=1 // pred_fallthru
      _
    // Predicated region
    $region22: #{bert_prediction_head_transform.1} parent=1 // pred_check
      _
    $region23: #{bert_prediction_head_transform.1} parent=1 // pred_check_branch
      %196 = sbr.rel (0) target = $region25
    $region24: #{bert_prediction_head_transform.1} parent=1 // pred_region
      _
    $region25: #{bert_prediction_head_transform.1} parent=1 // pred_fallthru
      _
    %197 = vsyncpa [#allocation3], 1

</llo_original>
